<compile_context>
chip_gen: v5e
topology: v5e:2x2
jax: 0.10.0
libtpu: 0.0.40
codegen_flags: <defaults>
</compile_context>

<pallas_src>
import functools

import jax
import jax.numpy as jnp
from jax.experimental import pallas as pl
from jax.experimental.pallas import tpu as pltpu


def _actor_kernel(x_ref, w0_ref, p_ref, out_ref, *,
                  n, hidden, b_actual, b12_row, b0_row):
    x = x_ref[...]                                    # (B_pad, n*n)  f32
    w0 = w0_ref[...]                                  # (n*n, hidden) bf16
    params = p_ref[...]                               # (rows, 128)   f32

    # neural_module: Linear + ReLU (bf16 MXU path, f32 accumulate, f32 VPU).
    h = jnp.dot(x.astype(jnp.bfloat16), w0,
                preferred_element_type=jnp.float32)   # (B_pad, hidden)
    b0 = params[b0_row:b0_row + 1, :hidden]           # (1, hidden)
    h = jnp.maximum(h + b0, 0.0)

    # Fused heads: one (hidden, 128) matmul.  Lanes 0:n  -> head-1 logits,
    # lanes n:2n -> head-2 logits, remaining lanes are zero padding.
    w12 = params[:hidden, :].astype(jnp.bfloat16)     # (hidden, 128)
    b12 = params[b12_row:b12_row + 1, :]              # (1, 128)
    logits = jnp.dot(h.astype(jnp.bfloat16), w12,
                     preferred_element_type=jnp.float32) + b12   # (B_pad, 128)

    # Global softmax over the flattened (B*N,) vector of each head
    # (== PyTorch Softmax(dim=0) on .view(-1)), in log-space, with padded
    # rows / padded lanes masked out of the reductions.
    rows = jax.lax.broadcasted_iota(jnp.int32, logits.shape, 0)
    cols = jax.lax.broadcasted_iota(jnp.int32, logits.shape, 1)
    valid_row = rows < b_actual
    head1 = valid_row & (cols < n)
    head2 = valid_row & (cols >= n) & (cols < 2 * n)
    is_h1_lane = cols < n

    neg_inf = jnp.float32(-jnp.inf)
    m1 = jnp.max(jnp.where(head1, logits, neg_inf))
    m2 = jnp.max(jnp.where(head2, logits, neg_inf))
    shifted = logits - jnp.where(is_h1_lane, m1, m2)

    # Clamp keeps the junk (padded) lanes from overflowing exp; valid lanes
    # are already <= 0 so the clamp is exact there.
    e = jnp.exp(jnp.minimum(shifted, 0.0))
    s1 = jnp.sum(jnp.where(head1, e, 0.0))
    s2 = jnp.sum(jnp.where(head2, e, 0.0))
    logz = jnp.log(jnp.where(is_h1_lane, s1, s2))

    # Single lane-dense (B_pad, 128) f32 log-prob slab; wrapper slices out
    # the two heads and the real batch rows.
    out_ref[...] = shifted - logz


def bicategorical_actor_logprobs(x_flat, w0_bf16, packed, *,
                                 n, hidden, b12_row, b0_row):
    """Returns (logprobs_first, logprobs_second), each flattened to (B*N,)."""
    b = x_flat.shape[0]
    b_pad = ((max(b, 8) + 7) // 8) * 8               # f32 sublane tile
    if b_pad != b:
        x_flat = jnp.pad(x_flat, ((0, b_pad - b), (0, 0)))

    kernel = functools.partial(
        _actor_kernel, n=n, hidden=hidden, b_actual=b,
        b12_row=b12_row, b0_row=b0_row)

    out = pl.pallas_call(
        kernel,
        out_shape=jax.ShapeDtypeStruct((b_pad, 128), jnp.float32),
        in_specs=[
            pl.BlockSpec(memory_space=pltpu.VMEM),   # x       (B_pad, n*n) f32
            pl.BlockSpec(memory_space=pltpu.VMEM),   # w0      (n*n, H)     bf16
            pl.BlockSpec(memory_space=pltpu.VMEM),   # packed  (rows, 128)  f32
        ],
        out_specs=pl.BlockSpec(memory_space=pltpu.VMEM),
    )(x_flat, w0_bf16, packed)

    lp1 = out[:b, :n].reshape(-1)                    # (B*N,) row-major, == .view(-1)
    lp2 = out[:b, n:2 * n].reshape(-1)
    return lp1, lp2


def bicategorical_actor_forward(x, params, sample_key):
    """Full forward: (actions, log_prob, (probs_first, probs_second))."""
    b = x.shape[0]
    x_flat = x.reshape(b, -1).astype(jnp.float32)
    lp1, lp2 = bicategorical_actor_logprobs(
        x_flat, params["w0"], params["packed"],
        n=params["n"], hidden=params["hidden"],
        b12_row=params["b12_row"], b0_row=params["b0_row"])

    # Glue: sample the two independent categoricals (BiCategoricalPolicy)
    # directly from log-probs and sum their log-probs.
    k1, k2 = jax.random.split(sample_key)
    a1 = jax.random.categorical(k1, lp1)
    a2 = jax.random.categorical(k2, lp2)
    actions = jnp.stack([a1, a2]).astype(jnp.int32).reshape(1, 2)
    log_prob = lp1[a1] + lp2[a2]

    probs = (jnp.exp(lp1), jnp.exp(lp2))             # policy seeds (sum to 1)
    return actions, log_prob, probs


def _kaiming_normal(key, shape, fan_in):
    # nn.init.kaiming_normal_ default: std = sqrt(2 / fan_in)
    std = jnp.sqrt(2.0 / fan_in)
    return std * jax.random.normal(key, shape, dtype=jnp.float32)


def init_params(key, n, hidden):
    """Init + pack parameters once (off the hot path).

    Packed slab layout (f32, shape (rows, 128)):
      rows 0:hidden        -> [w1 | w2 | 0]   fused head weights
      row  b12_row(=hidden)-> [b1 | b2 | 0]   fused head bias
      row  b0_row          -> [b0 | 0]        layer-0 bias (sublane-aligned row)
    w0 is stored separately in bf16 (largest operand -> halve its DMA bytes).
    """
    assert 2 * n <= 128 and hidden <= 128
    in_size = n * n
    ks = jax.random.split(key, 6)
    w0 = _kaiming_normal(ks[0], (in_size, hidden), fan_in=in_size)
    b0 = 0.01 * jax.random.normal(ks[1], (hidden,), dtype=jnp.float32)
    w1 = _kaiming_normal(ks[2], (hidden, n), fan_in=hidden)
    b1 = 0.01 * jax.random.normal(ks[3], (n,), dtype=jnp.float32)
    w2 = _kaiming_normal(ks[4], (hidden, n), fan_in=hidden)
    b2 = 0.01 * jax.random.normal(ks[5], (n,), dtype=jnp.float32)

    b12_row = hidden
    b0_row = ((hidden + 1 + 7) // 8) * 8
    total_rows = b0_row + 8

    packed = jnp.zeros((total_rows, 128), jnp.float32)
    packed = packed.at[:hidden, :n].set(w1)
    packed = packed.at[:hidden, n:2 * n].set(w2)
    packed = packed.at[b12_row, :n].set(b1)
    packed = packed.at[b12_row, n:2 * n].set(b2)
    packed = packed.at[b0_row, :hidden].set(b0)

    return {
        "w0": w0.astype(jnp.bfloat16),
        "packed": packed,
        "n": n,
        "hidden": hidden,
        "b12_row": b12_row,
        "b0_row": b0_row,
    }


if __name__ == "__main__":
    B, N, H = 2, 16, 32   # batch, observation side (NxN), hidden size
    root = jax.random.PRNGKey(0)
    k_param, k_x, k_sample = jax.random.split(root, 3)

    params = init_params(k_param, N, H)
    x = jax.random.normal(k_x, (B, N, N), dtype=jnp.float32)

    actions, log_prob, (p1, p2) = bicategorical_actor_forward(x, params, k_sample)
    jax.block_until_ready((actions, log_prob, p1, p2))

    # sanity: both flattened probability vectors sum to 1, shapes match spec
    assert p1.shape == (B * N,) and p2.shape == (B * N,)
    assert abs(float(jnp.sum(p1)) - 1.0) < 1e-4
    assert abs(float(jnp.sum(p2)) - 1.0) < 1e-4
    assert actions.shape == (1, 2)
    assert bool(jnp.isfinite(log_prob))
    assert 0 <= int(actions[0, 0]) < B * N and 0 <= int(actions[0, 1]) < B * N

    print("KERNEL_OK")
</pallas_src>

<mosaic_0001>
module attributes {stable_mosaic.version = 11 : i64} {
  func.func @_actor_kernel(%arg0: memref<8x256xf32, #tpu.memory_space<vmem>>, %arg1: memref<256x32xbf16, #tpu.memory_space<vmem>>, %arg2: memref<48x128xf32, #tpu.memory_space<vmem>>, %arg3: memref<8x128xf32, #tpu.memory_space<vmem>>) attributes {dimension_semantics = [], scalar_prefetch = 0 : i64, scratch_operands = 0 : i64, tpu.core_type = #tpu.core_type<tc>} {
    %c0 = arith.constant 0 : index
    %c0_0 = arith.constant 0 : index
    %0 = vector.load %arg0[%c0, %c0_0] : memref<8x256xf32, #tpu.memory_space<vmem>>, vector<8x256xf32>
    %c0_1 = arith.constant 0 : index
    %c0_2 = arith.constant 0 : index
    %1 = vector.load %arg1[%c0_1, %c0_2] : memref<256x32xbf16, #tpu.memory_space<vmem>>, vector<256x32xbf16>
    %c0_3 = arith.constant 0 : index
    %c0_4 = arith.constant 0 : index
    %2 = vector.load %arg2[%c0_3, %c0_4] : memref<48x128xf32, #tpu.memory_space<vmem>>, vector<48x128xf32>
    %3 = arith.truncf %0 : vector<8x256xf32> to vector<8x256xbf16>
    %cst = arith.constant dense<0.000000e+00> : vector<8x32xf32>
    %4 = tpu.matmul %3, %1, %cst {dimension_numbers = #tpu.dot_dimension_numbers<[1], [0], [0], [1], [0, 0, 1, 1], [], []>} : vector<8x256xbf16>, vector<256x32xbf16>, vector<8x32xf32> -> vector<8x32xf32>
    %5 = vector.extract_strided_slice %2 {offsets = [40, 0], sizes = [1, 32], strides = [1, 1]} : vector<48x128xf32> to vector<1x32xf32>
    %6 = vector.broadcast %5 : vector<1x32xf32> to vector<8x32xf32>
    %7 = arith.addf %4, %6 : vector<8x32xf32>
    %cst_5 = arith.constant 0.000000e+00 : f32
    %8 = vector.broadcast %cst_5 : f32 to vector<8x32xf32>
    %9 = arith.maximumf %7, %8 : vector<8x32xf32>
    %10 = vector.extract_strided_slice %2 {offsets = [0, 0], sizes = [32, 128], strides = [1, 1]} : vector<48x128xf32> to vector<32x128xf32>
    %11 = arith.truncf %10 : vector<32x128xf32> to vector<32x128xbf16>
    %12 = vector.extract_strided_slice %2 {offsets = [32, 0], sizes = [1, 128], strides = [1, 1]} : vector<48x128xf32> to vector<1x128xf32>
    %13 = arith.truncf %9 : vector<8x32xf32> to vector<8x32xbf16>
    %cst_6 = arith.constant dense<0.000000e+00> : vector<8x128xf32>
    %14 = tpu.matmul %13, %11, %cst_6 {dimension_numbers = #tpu.dot_dimension_numbers<[1], [0], [0], [1], [0, 0, 1, 1], [], []>} : vector<8x32xbf16>, vector<32x128xbf16>, vector<8x128xf32> -> vector<8x128xf32>
    %15 = vector.broadcast %12 : vector<1x128xf32> to vector<8x128xf32>
    %16 = arith.addf %14, %15 : vector<8x128xf32>
    %17 = tpu.iota {dimensions = array<i32: 0>} : vector<8x128xi32>
    %18 = tpu.iota {dimensions = array<i32: 1>} : vector<8x128xi32>
    %c2_i32 = arith.constant 2 : i32
    %19 = vector.broadcast %c2_i32 : i32 to vector<8x128xi32>
    %20 = arith.cmpi slt, %17, %19 : vector<8x128xi32>
    %c16_i32 = arith.constant 16 : i32
    %21 = vector.broadcast %c16_i32 : i32 to vector<8x128xi32>
    %22 = arith.cmpi slt, %18, %21 : vector<8x128xi32>
    %23 = arith.andi %20, %22 : vector<8x128xi1>
    %c16_i32_7 = arith.constant 16 : i32
    %24 = vector.broadcast %c16_i32_7 : i32 to vector<8x128xi32>
    %25 = arith.cmpi sge, %18, %24 : vector<8x128xi32>
    %26 = arith.andi %20, %25 : vector<8x128xi1>
    %c32_i32 = arith.constant 32 : i32
    %27 = vector.broadcast %c32_i32 : i32 to vector<8x128xi32>
    %28 = arith.cmpi slt, %18, %27 : vector<8x128xi32>
    %29 = arith.andi %26, %28 : vector<8x128xi1>
    %c16_i32_8 = arith.constant 16 : i32
    %30 = vector.broadcast %c16_i32_8 : i32 to vector<8x128xi32>
    %31 = arith.cmpi slt, %18, %30 : vector<8x128xi32>
    %cst_9 = arith.constant 0xFF800000 : f32
    %32 = vector.broadcast %cst_9 : f32 to vector<8x128xf32>
    %33 = arith.select %23, %16, %32 : vector<8x128xi1>, vector<8x128xf32>
    %34 = vector.shape_cast %33 : vector<8x128xf32> to vector<1x8x128xf32>
    %cst_10 = arith.constant dense<0xFF800000> : vector<1xf32>
    %35 = vector.multi_reduction <maximumf>, %34, %cst_10 [1, 2] : vector<1x8x128xf32> to vector<1xf32>
    %36 = vector.shape_cast %35 : vector<1xf32> to vector<1x1x1xf32>
    %37 = vector.extract %36[0, 0, 0] : f32 from vector<1x1x1xf32>
    %cst_11 = arith.constant 0xFF800000 : f32
    %38 = vector.broadcast %cst_11 : f32 to vector<8x128xf32>
    %39 = arith.select %29, %16, %38 : vector<8x128xi1>, vector<8x128xf32>
    %40 = vector.shape_cast %39 : vector<8x128xf32> to vector<1x8x128xf32>
    %cst_12 = arith.constant dense<0xFF800000> : vector<1xf32>
    %41 = vector.multi_reduction <maximumf>, %40, %cst_12 [1, 2] : vector<1x8x128xf32> to vector<1xf32>
    %42 = vector.shape_cast %41 : vector<1xf32> to vector<1x1x1xf32>
    %43 = vector.extract %42[0, 0, 0] : f32 from vector<1x1x1xf32>
    %44 = vector.broadcast %37 : f32 to vector<8x128xf32>
    %45 = vector.broadcast %43 : f32 to vector<8x128xf32>
    %46 = arith.select %31, %44, %45 : vector<8x128xi1>, vector<8x128xf32>
    %47 = arith.subf %16, %46 : vector<8x128xf32>
    %cst_13 = arith.constant 0.000000e+00 : f32
    %48 = vector.broadcast %cst_13 : f32 to vector<8x128xf32>
    %49 = arith.minimumf %47, %48 : vector<8x128xf32>
    %50 = math.exp %49 : vector<8x128xf32>
    %cst_14 = arith.constant 0.000000e+00 : f32
    %51 = vector.broadcast %cst_14 : f32 to vector<8x128xf32>
    %52 = arith.select %23, %50, %51 : vector<8x128xi1>, vector<8x128xf32>
    %53 = vector.shape_cast %52 : vector<8x128xf32> to vector<1x8x128xf32>
    %cst_15 = arith.constant dense<0.000000e+00> : vector<1xf32>
    %54 = vector.multi_reduction <add>, %53, %cst_15 [1, 2] : vector<1x8x128xf32> to vector<1xf32>
    %55 = vector.shape_cast %54 : vector<1xf32> to vector<1x1x1xf32>
    %56 = vector.extract %55[0, 0, 0] : f32 from vector<1x1x1xf32>
    %cst_16 = arith.constant 0.000000e+00 : f32
    %57 = vector.broadcast %cst_16 : f32 to vector<8x128xf32>
    %58 = arith.select %29, %50, %57 : vector<8x128xi1>, vector<8x128xf32>
    %59 = vector.shape_cast %58 : vector<8x128xf32> to vector<1x8x128xf32>
    %cst_17 = arith.constant dense<0.000000e+00> : vector<1xf32>
    %60 = vector.multi_reduction <add>, %59, %cst_17 [1, 2] : vector<1x8x128xf32> to vector<1xf32>
    %61 = vector.shape_cast %60 : vector<1xf32> to vector<1x1x1xf32>
    %62 = vector.extract %61[0, 0, 0] : f32 from vector<1x1x1xf32>
    %63 = vector.broadcast %56 : f32 to vector<8x128xf32>
    %64 = vector.broadcast %62 : f32 to vector<8x128xf32>
    %65 = arith.select %31, %63, %64 : vector<8x128xi1>, vector<8x128xf32>
    %66 = math.log %65 : vector<8x128xf32>
    %67 = arith.subf %47, %66 : vector<8x128xf32>
    %c0_18 = arith.constant 0 : index
    %c0_19 = arith.constant 0 : index
    %68 = vector.load %arg3[%c0_18, %c0_19] : memref<8x128xf32, #tpu.memory_space<vmem>>, vector<8x128xf32>
    tpu.vector_store %arg3[%c0_18, %c0_19], %67 {strides = array<i32>} : memref<8x128xf32, #tpu.memory_space<vmem>>, vector<8x128xf32>,
    return
  }
}

</mosaic_0001>

<llo_original>
// kernel: tpu_custom_call.1
$region0: #{tpu_custom_call.1}
  #allocation0 [shape = 'u32[]', space=smem, size = 0x4, offset = 0x4, fixed_abs, tag = 'smem constant byte address 0x4 - core index']
  #allocation1 [shape = 'u32[72,128]{1,0:T(1,128)}', space=vmem, size = 0x9000, scoped, tag = 'internal scratch']
  %s0 = inlined_call_operand.vmem [shape: f32[8,256], index: 0, kind: input, shape index: {}]
  %s1 = inlined_call_operand.vmem [shape: bf16[256,32], index: 1, kind: input, shape index: {}]
  %s2 = inlined_call_operand.vmem [shape: f32[48,128], index: 2, kind: input, shape index: {}]
  %s3 = inlined_call_operand.hbm [shape: f32[8,128], index: 3, kind: output, shape index: {}]
  %s4 = sld [smem:[#allocation0]]
  $region22: #{tpu_custom_call.1} parent=0
    _
  %s6 = ssub.s32 1, %s4
  %s7 = scalar_select 0, %s6, %s4
  $region1: #{tpu_custom_call.1} parent=0
    #allocation2 [shape = 'u8[4096]{0}', space=vmem, size = 0x1000, scoped, tag = 'output window, operand 0, single buffered']
    #allocation3 [shape = 's32[1]{0}', space=sflag, size = 0x4, scoped, tag = 'scoped memory for tpu_custom_call.1']
    %8 = vsyncpa [#allocation3], 0
    // Predicated region
    $region2: #{tpu_custom_call.1} parent=1 // pred_check
      _
    $region3: #{tpu_custom_call.1} parent=1 // pred_check_branch
      %10 = sbr.rel (0) target = $region5
    $region4: #{tpu_custom_call.1} parent=1 // pred_region
      _
    $region5: #{tpu_custom_call.1} parent=1 // pred_fallthru
      _
    // Predicated region
    $region6: #{tpu_custom_call.1} parent=1 // pred_check
      _
    $region7: #{tpu_custom_call.1} parent=1 // pred_check_branch
      %12 = sbr.rel (0) target = $region9
    $region8: #{tpu_custom_call.1} parent=1 // pred_region
      _
    $region9: #{tpu_custom_call.1} parent=1 // pred_fallthru
      _
    // Predicated region
    $region10: #{tpu_custom_call.1} parent=1 // pred_check
      _
    $region11: #{tpu_custom_call.1} parent=1 // pred_check_branch
      %14 = sbr.rel (0) target = $region13
    $region12: #{tpu_custom_call.1} parent=1 // pred_region
      _
    $region13: #{tpu_custom_call.1} parent=1 // pred_fallthru
      _
    %v16 = vld [vmem:[%s0] sm:$0xff]
    %v17 = vld [vmem:[%s0 + $0x8] sm:$0xff]
    %v18 = vld [vmem:[%s1] sm:$0xf]
    %v19 = vld [vmem:[%s1 + $0x4] sm:$0xf]
    %v20 = vld [vmem:[%s1 + $0x8] sm:$0xf]
    %v21 = vld [vmem:[%s1 + $0xc] sm:$0xf]
    %v22 = vld [vmem:[%s1 + $0x10] sm:$0xf]
    %v23 = vld [vmem:[%s1 + $0x14] sm:$0xf]
    %v24 = vld [vmem:[%s1 + $0x18] sm:$0xf]
    %v25 = vld [vmem:[%s1 + $0x1c] sm:$0xf]
    %v26 = vld [vmem:[%s1 + $0x20] sm:$0xf]
    %v27 = vld [vmem:[%s1 + $0x24] sm:$0xf]
    %v28 = vld [vmem:[%s1 + $0x28] sm:$0xf]
    %v29 = vld [vmem:[%s1 + $0x2c] sm:$0xf]
    %v30 = vld [vmem:[%s1 + $0x30] sm:$0xf]
    %v31 = vld [vmem:[%s1 + $0x34] sm:$0xf]
    %v32 = vld [vmem:[%s1 + $0x38] sm:$0xf]
    %v33 = vld [vmem:[%s1 + $0x3c] sm:$0xf]
    %v34 = vld [vmem:[%s1 + $0x40] sm:$0xf]
    %v35 = vld [vmem:[%s1 + $0x44] sm:$0xf]
    %v36 = vld [vmem:[%s1 + $0x48] sm:$0xf]
    %v37 = vld [vmem:[%s1 + $0x4c] sm:$0xf]
    %v38 = vld [vmem:[%s1 + $0x50] sm:$0xf]
    %v39 = vld [vmem:[%s1 + $0x54] sm:$0xf]
    %v40 = vld [vmem:[%s1 + $0x58] sm:$0xf]
    %v41 = vld [vmem:[%s1 + $0x5c] sm:$0xf]
    %v42 = vld [vmem:[%s1 + $0x60] sm:$0xf]
    %v43 = vld [vmem:[%s1 + $0x64] sm:$0xf]
    %v44 = vld [vmem:[%s1 + $0x68] sm:$0xf]
    %v45 = vld [vmem:[%s1 + $0x6c] sm:$0xf]
    %v46 = vld [vmem:[%s1 + $0x70] sm:$0xf]
    %v47 = vld [vmem:[%s1 + $0x74] sm:$0xf]
    %v48 = vld [vmem:[%s1 + $0x78] sm:$0xf]
    %v49 = vld [vmem:[%s1 + $0x7c] sm:$0xf]
    %v50 = vld [vmem:[%s2] sm:$0xff]
    %v51 = vld [vmem:[%s2 + $0x8] sm:$0xff]
    %v52 = vld [vmem:[%s2 + $0x10] sm:$0xff]
    %v53 = vld [vmem:[%s2 + $0x18] sm:$0xff]
    %v54 = vld [vmem:[%s2 + $0x20] sm:$0xff]
    %v55 = vld [vmem:[%s2 + $0x28] sm:$0xff]
    %v56 = vpack.c.bf16 %v16, %v16
    %v57 = vpack.c.bf16 %v17, %v17
    %v58 = vperm.slane %v55, 0
    %v91 = vunpack.c.l.b16 %v18
    %v92 = vunpack.c.l.b16 %v19
    %v93 = vunpack.c.l.b16 %v20
    %v94 = vunpack.c.l.b16 %v21
    %v95 = vunpack.c.l.b16 %v22
    %v96 = vunpack.c.l.b16 %v23
    %v97 = vunpack.c.l.b16 %v24
    %v98 = vunpack.c.l.b16 %v25
    %v99 = vunpack.c.l.b16 %v26
    %v100 = vunpack.c.l.b16 %v27
    %v101 = vunpack.c.l.b16 %v28
    %v102 = vunpack.c.l.b16 %v29
    %v103 = vunpack.c.l.b16 %v30
    %v104 = vunpack.c.l.b16 %v31
    %v105 = vunpack.c.l.b16 %v32
    %v106 = vunpack.c.l.b16 %v33
    %v107 = vunpack.c.l.b16 %v34
    %v108 = vunpack.c.l.b16 %v35
    %v109 = vunpack.c.l.b16 %v36
    %v110 = vunpack.c.l.b16 %v37
    %v111 = vunpack.c.l.b16 %v38
    %v112 = vunpack.c.l.b16 %v39
    %v113 = vunpack.c.l.b16 %v40
    %v114 = vunpack.c.l.b16 %v41
    %v115 = vunpack.c.l.b16 %v42
    %v116 = vunpack.c.l.b16 %v43
    %v117 = vunpack.c.l.b16 %v44
    %v118 = vunpack.c.l.b16 %v45
    %v119 = vunpack.c.l.b16 %v46
    %v120 = vunpack.c.l.b16 %v47
    %v121 = vunpack.c.l.b16 %v48
    %v122 = vunpack.c.l.b16 %v49
    %v123 = vpack.c.b16 %v92, %v91
    %v124 = vpack.c.b16 %v94, %v93
    %v125 = vpack.c.b16 %v96, %v95
    %v126 = vpack.c.b16 %v98, %v97
    %v127 = vpack.c.b16 %v100, %v99
    %v128 = vpack.c.b16 %v102, %v101
    %v129 = vpack.c.b16 %v104, %v103
    %v130 = vpack.c.b16 %v106, %v105
    %v131 = vpack.c.b16 %v108, %v107
    %v132 = vpack.c.b16 %v110, %v109
    %v133 = vpack.c.b16 %v112, %v111
    %v134 = vpack.c.b16 %v114, %v113
    %v135 = vpack.c.b16 %v116, %v115
    %v136 = vpack.c.b16 %v118, %v117
    %v137 = vpack.c.b16 %v120, %v119
    %v138 = vpack.c.b16 %v122, %v121
    %155 = vmatpush.bf16.msra.mxu0 %v130
    %156 = vmatpush.bf16.msra.mxu0 %v129
    %157 = vmatpush.bf16.msra.mxu0 %v128
    %158 = vmatpush.bf16.msra.mxu0 %v127
    %159 = vmatpush.bf16.msra.mxu0 %v126
    %160 = vmatpush.bf16.msra.mxu0 %v125
    %161 = vmatpush.bf16.msra.mxu0 %v124
    %162 = vmatpush.bf16.msra.mxu0 %v123
    %163 = vmatmul.bf16.gmra.mxu0 %v56
    %v164 = vpop.f32.mrf.mxu0
    %v165 = vadd.f32 %v58, %v164
    %v166 = vpop.f32.mrf.mxu0
    %167 = vdwg.mxu0
    %168 = vmatpush.bf16.msra.mxu0 %v138
    %169 = vmatpush.bf16.msra.mxu0 %v137
    %170 = vmatpush.bf16.msra.mxu0 %v136
    %171 = vmatpush.bf16.msra.mxu0 %v135
    %172 = vmatpush.bf16.msra.mxu0 %v134
    %173 = vmatpush.bf16.msra.mxu0 %v133
    %174 = vmatpush.bf16.msra.mxu0 %v132
    %175 = vmatpush.bf16.msra.mxu0 %v131
    %176 = vmatmul.bf16.gmra.mxu0 %v57
    %v177 = vpop.f32.mrf.mxu0
    %v178 = vadd.f32 %v165, %v177
    %v179 = vpop.f32.mrf.mxu0
    %180 = vdwg.mxu0
    %v181 = vmax.f32 %v178, 0.0
    %v182 = vpack.c.bf16 %v51, %v50
    %v183 = vpack.c.bf16 %v53, %v52
    %v184 = vpack.c.bf16 %v181, %v181
    %v185 = vperm.slane %v54, 0
    %vm186 = vcmask 261120
    %v188 = vsel %vm186, %v184, 0
    %190 = vmatpush.bf16.msra.mxu0 0
    %191 = vmatpush.bf16.msra.mxu0 0
    %192 = vmatpush.bf16.msra.mxu0 0
    %193 = vmatpush.bf16.msra.mxu0 0
    %194 = vmatpush.bf16.msra.mxu0 0
    %195 = vmatpush.bf16.msra.mxu0 0
    %196 = vmatpush.bf16.msra.mxu0 %v183
    %197 = vmatpush.bf16.msra.mxu0 %v182
    %198 = vmatmul.bf16.gmra.mxu0 %v188
    %v199 = vpop.f32.mrf.mxu0
    %v200 = vadd.f32 %v185, %v199
    %v201 = vpop.f32.mrf.mxu0
    %202 = vdwg.mxu0
    %v203 = vlaneseq
    %v204 = vshrl.u32 %v203, 7
    %v205 = vlaneseq
    %v206 = vand.u32 %v205, 127
    %vm207 = vcmp.lt.s32.totalorder %v204, 2
    %vm208 = vcmp.lt.s32.totalorder %v206, 16
    %vm209 = vmand %vm207, %vm208
    %vm210 = vcmp.ge.s32.totalorder %v206, 16
    %vm211 = vmand %vm207, %vm210
    %vm212 = vcmp.lt.s32.totalorder %v206, 32
    %vm213 = vmand %vm211, %vm212
    %v214 = vsel %vm209, %v200, -inf
    %215 = vmax.xlane.f32.xlu0 %v214
    %v216 = vpop.xlane.xlu0 %215
    %v217 = vrot.slane %v216, 4
    %v218 = vmax.f32 %v216, %v217
    %v219 = vrot.slane %v218, 2
    %v220 = vmax.f32 %v218, %v219
    %v221 = vrot.slane %v220, 1
    %v222 = vmax.f32 %v220, %v221
    %s223 = vtos %v222
    %v224 = vsel %vm213, %v200, -inf
    %225 = vmax.xlane.f32.xlu0 %v224
    %v226 = vpop.xlane.xlu0 %225
    %v227 = vrot.slane %v226, 4
    %v228 = vmax.f32 %v226, %v227
    %v229 = vrot.slane %v228, 2
    %v230 = vmax.f32 %v228, %v229
    %v231 = vrot.slane %v230, 1
    %v232 = vmax.f32 %v230, %v231
    %s233 = vtos %v232
    %v234 = vstv %s223
    %v235 = vstv %s233
    %v236 = vsel %vm208, %v234, %v235
    %v237 = vsub.f32 %v200, %v236
    %v238 = vmin.f32 %v237, 0.0
    %v239 = vmul.f32 %v238, 1.442695
    %v240 = vpow.pop %v239
    %v241 = vsel %vm209, %v240, 0.0
    %242 = vadd.xlane.f32.xlu0 %v241
    %v243 = vpop.xlane.xlu0 %242
    %v244 = vrot.slane %v243, 4
    %v245 = vadd.f32 %v243, %v244
    %v246 = vrot.slane %v245, 2
    %v247 = vadd.f32 %v245, %v246
    %v248 = vrot.slane %v247, 1
    %v249 = vadd.f32 %v247, %v248
    %s250 = vtos %v249
    %v251 = vsel %vm213, %v240, 0.0
    %252 = vadd.xlane.f32.xlu0 %v251
    %v253 = vpop.xlane.xlu0 %252
    %v254 = vrot.slane %v253, 4
    %v255 = vadd.f32 %v253, %v254
    %v256 = vrot.slane %v255, 2
    %v257 = vadd.f32 %v255, %v256
    %v258 = vrot.slane %v257, 1
    %v259 = vadd.f32 %v257, %v258
    %s260 = vtos %v259
    %v261 = vstv %s250
    %v262 = vstv %s260
    %v263 = vsel %vm208, %v261, %v262
    %v264 = vlog2.pop %v263
    %v265 = vmul.f32 %v264, 0.6931472
    %v266 = vsub.f32 %v237, %v265
    %267 = vst [vmem:[#allocation2] sm:$0xff] %v266
    // Predicated region
    $region14: #{tpu_custom_call.1} parent=1 // pred_check
      _
    $region15: #{tpu_custom_call.1} parent=1 // pred_check_branch
      %269 = sbr.rel (0) target = $region17
    $region16: #{tpu_custom_call.1} parent=1 // pred_region
      %271 = vsyncadd [#allocation3], 0
      %s273 = sshll.u32 [#allocation2], 4
      %s274 = int_to_ptr.vmem [resolvable:$true] %s273
      %s275 = sshll.u32 %s3, 4
      %s276 = int_to_ptr.hbm [resolvable:$true] %s275
      %278 = dma.vmem_to_hbm [thread:$0]  %s274, 128, %s276, [#allocation3]
    $region17: #{tpu_custom_call.1} parent=1 // pred_fallthru
      _
    // Predicated region
    $region18: #{tpu_custom_call.1} parent=1 // pred_check
      _
    $region19: #{tpu_custom_call.1} parent=1 // pred_check_branch
      %280 = sbr.rel (0) target = $region21
    $region20: #{tpu_custom_call.1} parent=1 // pred_region
      %282 = dma.done [#allocation3], 128
    $region21: #{tpu_custom_call.1} parent=1 // pred_fallthru
      _
    %283 = vsyncpa [#allocation3], 1

</llo_original>
